<compile_context>
chip_gen: v6e
topology: v6e:2x2x1
jax: 0.10.0
libtpu: 0.0.40
codegen_flags: <defaults>
</compile_context>

<pallas_src>
import math
import jax
import jax.numpy as jnp
from jax.experimental import pallas as pl
from jax.experimental.pallas import tpu as pltpu

_LANE = 128     # vreg lane width
_SUBLANE = 8    # vreg sublane count (f32)


def _round_up(n, m):
    return ((n + m - 1) // m) * m


def _mlp_kernel(x_ref, w1_ref, b1_ref, w2_ref, b2_ref, w3_ref, b3_ref, o_ref):
    # One batch tile (TB, Dp) resident in VMEM; weights resident across steps.
    x = x_ref[...]
    # Biases loaded once per tile; (1, H) broadcasts against (TB, H).
    b1 = b1_ref[...]
    b2 = b2_ref[...]
    b3 = b3_ref[...]

    h1 = jnp.dot(x, w1_ref[...], preferred_element_type=jnp.float32) + b1
    h1 = jnp.maximum(h1, 0.0)
    h2 = jnp.dot(h1, w2_ref[...], preferred_element_type=jnp.float32) + b2
    h2 = jnp.maximum(h2, 0.0)
    z = jnp.dot(h2, w3_ref[...], preferred_element_type=jnp.float32) + b3
    # sigmoid(z) = 0.5 * (1 + tanh(z/2)): single EUP transcendental, stable.
    o_ref[...] = (0.5 * (1.0 + jnp.tanh(0.5 * z))).astype(o_ref.dtype)


def weight_mlp_forward(x, params, *, batch_tile=256):
    """Forward pass of WeightMLP.

    x: (batch, input_dim) or (input_dim,) float32
    params: dict with w1 (D,H), b1 (1,H), w2 (H,H), b2 (1,H), w3 (H,D), b3 (1,D)
    """
    original_ndim = x.ndim
    if original_ndim == 1:
        x = x.reshape(1, -1)
    B, D = x.shape
    H = params["w1"].shape[1]

    # Lane-pad feature dims to 128; pick the batch tile (>= batch, mult of 8,
    # capped at `batch_tile` when the batch is big enough to tile).
    Dp = _round_up(D, _LANE)
    Hp = _round_up(H, _LANE)
    TB = batch_tile if B >= batch_tile else _round_up(B, _SUBLANE)
    Bp = _round_up(B, TB)

    def pad2(a, rows, cols):
        return jnp.zeros((rows, cols), a.dtype).at[: a.shape[0], : a.shape[1]].set(a)

    x_p = pad2(x, Bp, Dp)
    w1 = pad2(params["w1"], Dp, Hp)
    b1 = pad2(params["b1"], 1, Hp)
    w2 = pad2(params["w2"], Hp, Hp)
    b2 = pad2(params["b2"], 1, Hp)
    w3 = pad2(params["w3"], Hp, Dp)
    b3 = pad2(params["b3"], 1, Dp)

    grid = (Bp // TB,)

    # VMEM budget (per step, f32): double-buffered x/out tiles = 4*TB*Dp*4 B
    # plus resident weights (~(Dp+Hp)*Hp*4 + Hp*Dp*4).  With TB=256 and
    # Dp=Hp=128 this is well under 1 MiB, far below v7x's 32 MiB scoped limit.
    out_p = pl.pallas_call(
        _mlp_kernel,
        out_shape=jax.ShapeDtypeStruct((Bp, Dp), x.dtype),
        grid=grid,
        in_specs=[
            pl.BlockSpec((TB, Dp), lambda i: (i, 0)),   # x tile (pipelined)
            pl.BlockSpec((Dp, Hp), lambda i: (0, 0)),   # w1 (VMEM-resident)
            pl.BlockSpec((1, Hp), lambda i: (0, 0)),    # b1
            pl.BlockSpec((Hp, Hp), lambda i: (0, 0)),   # w2
            pl.BlockSpec((1, Hp), lambda i: (0, 0)),    # b2
            pl.BlockSpec((Hp, Dp), lambda i: (0, 0)),   # w3
            pl.BlockSpec((1, Dp), lambda i: (0, 0)),    # b3
        ],
        out_specs=pl.BlockSpec((TB, Dp), lambda i: (i, 0)),
        compiler_params=pltpu.CompilerParams(
            dimension_semantics=("parallel",)),          # 2x on v7x dual-TC
    )(x_p, w1, b1, w2, b2, w3, b3)

    out = out_p[:B, :D]
    if original_ndim == 1:
        out = out.reshape(-1)
    return out


def init_weight_mlp_params(key, input_dim, hidden_dim=64):
    """Deterministic init mirroring torch.nn.Linear defaults
    (uniform(-1/sqrt(fan_in), 1/sqrt(fan_in)) for both weight and bias)."""
    ks = jax.random.split(key, 6)

    def linear(kw, kb, fan_in, fan_out):
        bound = 1.0 / math.sqrt(fan_in)
        # stored already transposed: (fan_in, fan_out) so kernel does x @ W
        w = jax.random.uniform(kw, (fan_in, fan_out), jnp.float32, -bound, bound)
        b = jax.random.uniform(kb, (1, fan_out), jnp.float32, -bound, bound)
        return w, b

    w1, b1 = linear(ks[0], ks[1], input_dim, hidden_dim)
    w2, b2 = linear(ks[2], ks[3], hidden_dim, hidden_dim)
    w3, b3 = linear(ks[4], ks[5], hidden_dim, input_dim)
    return {"w1": w1, "b1": b1, "w2": w2, "b2": b2, "w3": w3, "b3": b3}


def _reference_forward(x, p):
    orig_ndim = x.ndim
    if orig_ndim == 1:
        x = x.reshape(1, -1)
    h1 = jnp.maximum(x @ p["w1"] + p["b1"], 0.0)
    h2 = jnp.maximum(h1 @ p["w2"] + p["b2"], 0.0)
    out = jax.nn.sigmoid(h2 @ p["w3"] + p["b3"])
    if orig_ndim == 1:
        out = out.reshape(-1)
    return out


if __name__ == "__main__":
    key = jax.random.PRNGKey(0)
    k_x, k_p, k_big = jax.random.split(key, 3)

    batch, input_dim, hidden_dim = 8, 32, 64
    x = jax.random.normal(k_x, (batch, input_dim), dtype=jnp.float32)
    params = init_weight_mlp_params(k_p, input_dim, hidden_dim)

    out = jax.block_until_ready(weight_mlp_forward(x, params))
    ref = jax.block_until_ready(_reference_forward(x, params))
    assert out.shape == (batch, input_dim)
    assert jnp.allclose(out, ref, atol=1e-5, rtol=1e-5), "mismatch vs reference"

    # 1-D input path (unsqueeze/squeeze behavior of WeightMLP.forward)
    x1d = x[0]
    out1d = jax.block_until_ready(weight_mlp_forward(x1d, params))
    ref1d = jax.block_until_ready(_reference_forward(x1d, params))
    assert out1d.shape == (input_dim,)
    assert jnp.allclose(out1d, ref1d, atol=1e-5, rtol=1e-5), "1-D mismatch"

    # Exercise the batch-tiled grid path (grid > 1, padded last tile).
    xb = jax.random.normal(k_big, (300, input_dim), dtype=jnp.float32)
    outb = jax.block_until_ready(weight_mlp_forward(xb, params))
    refb = jax.block_until_ready(_reference_forward(xb, params))
    assert outb.shape == (300, input_dim)
    assert jnp.allclose(outb, refb, atol=1e-5, rtol=1e-5), "tiled mismatch"

    print("KERNEL_OK")
</pallas_src>

<mosaic_0001>
module attributes {stable_mosaic.version = 11 : i64} {
  func.func @_mlp_kernel(%arg0: i32, %arg1: memref<8x128xf32, #tpu.memory_space<vmem>>, %arg2: memref<128x128xf32, #tpu.memory_space<vmem>>, %arg3: memref<1x128xf32, #tpu.memory_space<vmem>>, %arg4: memref<128x128xf32, #tpu.memory_space<vmem>>, %arg5: memref<1x128xf32, #tpu.memory_space<vmem>>, %arg6: memref<128x128xf32, #tpu.memory_space<vmem>>, %arg7: memref<1x128xf32, #tpu.memory_space<vmem>>, %arg8: memref<8x128xf32, #tpu.memory_space<vmem>>) attributes {dimension_semantics = [#tpu.dimension_semantics<parallel>], iteration_bounds = array<i64: 1>, scalar_prefetch = 0 : i64, scratch_operands = 0 : i64, tpu.core_type = #tpu.core_type<tc>, window_params = [{transform_indices = @transform_0, window_bounds = array<i64: 8, 128>}, {pipeline_mode = #tpu.pipeline_mode<synchronous>, transform_indices = @transform_1, window_bounds = array<i64: 128, 128>}, {pipeline_mode = #tpu.pipeline_mode<synchronous>, transform_indices = @transform_2, window_bounds = array<i64: 1, 128>}, {pipeline_mode = #tpu.pipeline_mode<synchronous>, transform_indices = @transform_3, window_bounds = array<i64: 128, 128>}, {pipeline_mode = #tpu.pipeline_mode<synchronous>, transform_indices = @transform_4, window_bounds = array<i64: 1, 128>}, {pipeline_mode = #tpu.pipeline_mode<synchronous>, transform_indices = @transform_5, window_bounds = array<i64: 128, 128>}, {pipeline_mode = #tpu.pipeline_mode<synchronous>, transform_indices = @transform_6, window_bounds = array<i64: 1, 128>}, {transform_indices = @transform_7, window_bounds = array<i64: 8, 128>}]} {
    %c0 = arith.constant 0 : index
    %c0_0 = arith.constant 0 : index
    %0 = vector.load %arg1[%c0, %c0_0] : memref<8x128xf32, #tpu.memory_space<vmem>>, vector<8x128xf32>
    %c0_1 = arith.constant 0 : index
    %c0_2 = arith.constant 0 : index
    %1 = vector.load %arg3[%c0_1, %c0_2] : memref<1x128xf32, #tpu.memory_space<vmem>>, vector<1x128xf32>
    %c0_3 = arith.constant 0 : index
    %c0_4 = arith.constant 0 : index
    %2 = vector.load %arg5[%c0_3, %c0_4] : memref<1x128xf32, #tpu.memory_space<vmem>>, vector<1x128xf32>
    %c0_5 = arith.constant 0 : index
    %c0_6 = arith.constant 0 : index
    %3 = vector.load %arg7[%c0_5, %c0_6] : memref<1x128xf32, #tpu.memory_space<vmem>>, vector<1x128xf32>
    %c0_7 = arith.constant 0 : index
    %c0_8 = arith.constant 0 : index
    %4 = vector.load %arg2[%c0_7, %c0_8] : memref<128x128xf32, #tpu.memory_space<vmem>>, vector<128x128xf32>
    %cst = arith.constant dense<0.000000e+00> : vector<8x128xf32>
    %5 = tpu.matmul %0, %4, %cst {dimension_numbers = #tpu.dot_dimension_numbers<[1], [0], [0], [1], [0, 0, 1, 1], [], []>} : vector<8x128xf32>, vector<128x128xf32>, vector<8x128xf32> -> vector<8x128xf32>
    %6 = vector.broadcast %1 : vector<1x128xf32> to vector<8x128xf32>
    %7 = arith.addf %5, %6 : vector<8x128xf32>
    %cst_9 = arith.constant 0.000000e+00 : f32
    %8 = vector.broadcast %cst_9 : f32 to vector<8x128xf32>
    %9 = arith.maximumf %7, %8 : vector<8x128xf32>
    %c0_10 = arith.constant 0 : index
    %c0_11 = arith.constant 0 : index
    %10 = vector.load %arg4[%c0_10, %c0_11] : memref<128x128xf32, #tpu.memory_space<vmem>>, vector<128x128xf32>
    %cst_12 = arith.constant dense<0.000000e+00> : vector<8x128xf32>
    %11 = tpu.matmul %9, %10, %cst_12 {dimension_numbers = #tpu.dot_dimension_numbers<[1], [0], [0], [1], [0, 0, 1, 1], [], []>} : vector<8x128xf32>, vector<128x128xf32>, vector<8x128xf32> -> vector<8x128xf32>
    %12 = vector.broadcast %2 : vector<1x128xf32> to vector<8x128xf32>
    %13 = arith.addf %11, %12 : vector<8x128xf32>
    %cst_13 = arith.constant 0.000000e+00 : f32
    %14 = vector.broadcast %cst_13 : f32 to vector<8x128xf32>
    %15 = arith.maximumf %13, %14 : vector<8x128xf32>
    %c0_14 = arith.constant 0 : index
    %c0_15 = arith.constant 0 : index
    %16 = vector.load %arg6[%c0_14, %c0_15] : memref<128x128xf32, #tpu.memory_space<vmem>>, vector<128x128xf32>
    %cst_16 = arith.constant dense<0.000000e+00> : vector<8x128xf32>
    %17 = tpu.matmul %15, %16, %cst_16 {dimension_numbers = #tpu.dot_dimension_numbers<[1], [0], [0], [1], [0, 0, 1, 1], [], []>} : vector<8x128xf32>, vector<128x128xf32>, vector<8x128xf32> -> vector<8x128xf32>
    %18 = vector.broadcast %3 : vector<1x128xf32> to vector<8x128xf32>
    %19 = arith.addf %17, %18 : vector<8x128xf32>
    %cst_17 = arith.constant 5.000000e-01 : f32
    %20 = vector.broadcast %cst_17 : f32 to vector<8x128xf32>
    %21 = arith.mulf %20, %19 : vector<8x128xf32>
    %22 = math.tanh %21 : vector<8x128xf32>
    %cst_18 = arith.constant 1.000000e+00 : f32
    %23 = vector.broadcast %cst_18 : f32 to vector<8x128xf32>
    %24 = arith.addf %23, %22 : vector<8x128xf32>
    %cst_19 = arith.constant 5.000000e-01 : f32
    %25 = vector.broadcast %cst_19 : f32 to vector<8x128xf32>
    %26 = arith.mulf %25, %24 : vector<8x128xf32>
    %c0_20 = arith.constant 0 : index
    %c0_21 = arith.constant 0 : index
    %27 = vector.load %arg8[%c0_20, %c0_21] : memref<8x128xf32, #tpu.memory_space<vmem>>, vector<8x128xf32>
    tpu.vector_store %arg8[%c0_20, %c0_21], %26 {strides = array<i32>} : memref<8x128xf32, #tpu.memory_space<vmem>>, vector<8x128xf32>,
    return
  }
  func.func @transform_0(%arg0: i32) -> (i32, i32) {
    %c0_i32 = arith.constant 0 : i32
    %c0_i32_0 = arith.constant 0 : i32
    return %arg0, %c0_i32 : i32, i32
  }
  func.func @transform_1(%arg0: i32) -> (i32, i32) {
    %c0_i32 = arith.constant 0 : i32
    %c0_i32_0 = arith.constant 0 : i32
    %c0_i32_1 = arith.constant 0 : i32
    return %c0_i32, %c0_i32_0 : i32, i32
  }
  func.func @transform_2(%arg0: i32) -> (i32, i32) {
    %c0_i32 = arith.constant 0 : i32
    %c0_i32_0 = arith.constant 0 : i32
    %c0_i32_1 = arith.constant 0 : i32
    return %c0_i32, %c0_i32_0 : i32, i32
  }
  func.func @transform_3(%arg0: i32) -> (i32, i32) {
    %c0_i32 = arith.constant 0 : i32
    %c0_i32_0 = arith.constant 0 : i32
    %c0_i32_1 = arith.constant 0 : i32
    return %c0_i32, %c0_i32_0 : i32, i32
  }
  func.func @transform_4(%arg0: i32) -> (i32, i32) {
    %c0_i32 = arith.constant 0 : i32
    %c0_i32_0 = arith.constant 0 : i32
    %c0_i32_1 = arith.constant 0 : i32
    return %c0_i32, %c0_i32_0 : i32, i32
  }
  func.func @transform_5(%arg0: i32) -> (i32, i32) {
    %c0_i32 = arith.constant 0 : i32
    %c0_i32_0 = arith.constant 0 : i32
    %c0_i32_1 = arith.constant 0 : i32
    return %c0_i32, %c0_i32_0 : i32, i32
  }
  func.func @transform_6(%arg0: i32) -> (i32, i32) {
    %c0_i32 = arith.constant 0 : i32
    %c0_i32_0 = arith.constant 0 : i32
    %c0_i32_1 = arith.constant 0 : i32
    return %c0_i32, %c0_i32_0 : i32, i32
  }
  func.func @transform_7(%arg0: i32) -> (i32, i32) {
    %c0_i32 = arith.constant 0 : i32
    %c0_i32_0 = arith.constant 0 : i32
    return %arg0, %c0_i32 : i32, i32
  }
}

</mosaic_0001>

<llo_original>
// kernel: tpu_custom_call.1
$region0: #{tpu_custom_call.1}
  #allocation0 [shape = 'u32[]', space=smem, size = 0x4, offset = 0x4, fixed_abs, tag = 'smem constant byte address 0x4 - core index']
  #allocation1 [shape = 'u32[144,128]{1,0:T(1,128)}', space=vmem, size = 0x12000, scoped, tag = 'internal scratch']
  %s0 = inlined_call_operand.hbm [shape: f32[8,128], index: 0, kind: input, shape index: {}]
  %s1 = inlined_call_operand.hbm [shape: f32[128,128], index: 1, kind: input, shape index: {}]
  %s2 = inlined_call_operand.vmem [shape: f32[1,128], index: 2, kind: input, shape index: {}]
  %s3 = inlined_call_operand.hbm [shape: f32[128,128], index: 3, kind: input, shape index: {}]
  %s4 = inlined_call_operand.vmem [shape: f32[1,128], index: 4, kind: input, shape index: {}]
  %s5 = inlined_call_operand.hbm [shape: f32[128,128], index: 5, kind: input, shape index: {}]
  %s6 = inlined_call_operand.vmem [shape: f32[1,128], index: 6, kind: input, shape index: {}]
  %s7 = inlined_call_operand.hbm [shape: f32[8,128], index: 7, kind: output, shape index: {}]
  %s8 = sld [smem:[#allocation0]]
  $region54: #{tpu_custom_call.1} parent=0
    _
  %s10 = ssub.s32 1, %s8
  %s11 = scalar_select 0, %s10, %s8
  $region1: #{tpu_custom_call.1} parent=0
    #allocation2 [shape = 'u8[4096]{0}', space=vmem, size = 0x1000, scoped, tag = 'input window, operand 0, single buffered']
    #allocation3 [shape = 's32[1]{0}', space=sflag, size = 0x4, scoped, tag = 'scoped memory for tpu_custom_call.1']
    #allocation4 [shape = 's32[1]{0}', space=sflag, size = 0x4, scoped, tag = 'scoped memory for tpu_custom_call.1']
    #allocation5 [shape = 'u8[65536]{0}', space=vmem, size = 0x10000, scoped, tag = 'input window, operand 1, single buffered']
    #allocation6 [shape = 's32[1]{0}', space=sflag, size = 0x4, scoped, tag = 'scoped memory for tpu_custom_call.1']
    #allocation7 [shape = 'u8[65536]{0}', space=vmem, size = 0x10000, scoped, tag = 'input window, operand 3, single buffered']
    #allocation8 [shape = 'u8[65536]{0}', space=vmem, size = 0x10000, scoped, tag = 'input window, operand 5, single buffered']
    #allocation9 [shape = 's32[1]{0}', space=sflag, size = 0x4, scoped, tag = 'scoped memory for tpu_custom_call.1']
    #allocation10 [shape = 'u8[4096]{0}', space=vmem, size = 0x1000, scoped, tag = 'output window, operand 0, single buffered']
    %12 = vsyncpa [#allocation3], 0
    %13 = vsyncpa [#allocation6], 0
    %14 = vsyncpa [#allocation9], 0
    %15 = vsyncpa [#allocation4], 0
    // Predicated region
    $region2: #{tpu_custom_call.1} parent=1 // pred_check
      _
    $region3: #{tpu_custom_call.1} parent=1 // pred_check_branch
      %17 = sbr.rel (0) target = $region5
    $region4: #{tpu_custom_call.1} parent=1 // pred_region
      %s19 = ssub.s32 128, 128
      %20 = vsyncadd [#allocation3], %s19
      %s22 = sshll.u32 [#allocation2], 4
      %s23 = int_to_ptr.vmem [resolvable:$true] %s22
      %25 = dma.hbm_to_vmem [thread:$0]  %s0, 128, %s23, [#allocation3]
    $region5: #{tpu_custom_call.1} parent=1 // pred_fallthru
      _
    // Predicated region
    $region6: #{tpu_custom_call.1} parent=1 // pred_check
      _
    $region7: #{tpu_custom_call.1} parent=1 // pred_check_branch
      %27 = sbr.rel (0) target = $region9
    $region8: #{tpu_custom_call.1} parent=1 // pred_region
      %s29 = ssub.s32 2048, 2048
      %30 = vsyncadd [#allocation6], %s29
      %s31 = sshll.u32 [#allocation5], 4
      %s32 = int_to_ptr.vmem [resolvable:$true] %s31
      %37 = dma.hbm_to_vmem [thread:$0]  %s1, 2048, %s32, [#allocation6], 128, 128, 8
    $region9: #{tpu_custom_call.1} parent=1 // pred_fallthru
      _
    // Predicated region
    $region10: #{tpu_custom_call.1} parent=1 // pred_check
      _
    $region11: #{tpu_custom_call.1} parent=1 // pred_check_branch
      %39 = sbr.rel (0) target = $region13
    $region12: #{tpu_custom_call.1} parent=1 // pred_region
      _
    $region13: #{tpu_custom_call.1} parent=1 // pred_fallthru
      _
    // Predicated region
    $region14: #{tpu_custom_call.1} parent=1 // pred_check
      _
    $region15: #{tpu_custom_call.1} parent=1 // pred_check_branch
      %41 = sbr.rel (0) target = $region17
    $region16: #{tpu_custom_call.1} parent=1 // pred_region
      %s43 = ssub.s32 2048, 2048
      %44 = vsyncadd [#allocation6], %s43
      %s45 = sshll.u32 [#allocation7], 4
      %s46 = int_to_ptr.vmem [resolvable:$true] %s45
      %51 = dma.hbm_to_vmem [thread:$0]  %s3, 2048, %s46, [#allocation6], 128, 128, 8
    $region17: #{tpu_custom_call.1} parent=1 // pred_fallthru
      _
    // Predicated region
    $region18: #{tpu_custom_call.1} parent=1 // pred_check
      _
    $region19: #{tpu_custom_call.1} parent=1 // pred_check_branch
      %53 = sbr.rel (0) target = $region21
    $region20: #{tpu_custom_call.1} parent=1 // pred_region
      _
    $region21: #{tpu_custom_call.1} parent=1 // pred_fallthru
      _
    // Predicated region
    $region22: #{tpu_custom_call.1} parent=1 // pred_check
      _
    $region23: #{tpu_custom_call.1} parent=1 // pred_check_branch
      %55 = sbr.rel (0) target = $region25
    $region24: #{tpu_custom_call.1} parent=1 // pred_region
      %s57 = ssub.s32 2048, 2048
      %58 = vsyncadd [#allocation9], %s57
      %s59 = sshll.u32 [#allocation8], 4
      %s60 = int_to_ptr.vmem [resolvable:$true] %s59
      %65 = dma.hbm_to_vmem [thread:$0]  %s5, 2048, %s60, [#allocation9], 128, 128, 8
    $region25: #{tpu_custom_call.1} parent=1 // pred_fallthru
      _
    // Predicated region
    $region26: #{tpu_custom_call.1} parent=1 // pred_check
      _
    $region27: #{tpu_custom_call.1} parent=1 // pred_check_branch
      %67 = sbr.rel (0) target = $region29
    $region28: #{tpu_custom_call.1} parent=1 // pred_region
      _
    $region29: #{tpu_custom_call.1} parent=1 // pred_fallthru
      _
    // Predicated region
    $region30: #{tpu_custom_call.1} parent=1 // pred_check
      _
    $region31: #{tpu_custom_call.1} parent=1 // pred_check_branch
      %69 = sbr.rel (0) target = $region33
    $region32: #{tpu_custom_call.1} parent=1 // pred_region
      %70 = dma.done [#allocation3], 128
    $region33: #{tpu_custom_call.1} parent=1 // pred_fallthru
      _
    // Predicated region
    $region34: #{tpu_custom_call.1} parent=1 // pred_check
      _
    $region35: #{tpu_custom_call.1} parent=1 // pred_check_branch
      %72 = sbr.rel (0) target = $region37
    $region36: #{tpu_custom_call.1} parent=1 // pred_region
      %73 = dma.done [#allocation6], 2048
    $region37: #{tpu_custom_call.1} parent=1 // pred_fallthru
      _
    // Predicated region
    $region38: #{tpu_custom_call.1} parent=1 // pred_check
      _
    $region39: #{tpu_custom_call.1} parent=1 // pred_check_branch
      %75 = sbr.rel (0) target = $region41
    $region40: #{tpu_custom_call.1} parent=1 // pred_region
      %76 = dma.done [#allocation6], 2048
    $region41: #{tpu_custom_call.1} parent=1 // pred_fallthru
      _
    // Predicated region
    $region42: #{tpu_custom_call.1} parent=1 // pred_check
      _
    $region43: #{tpu_custom_call.1} parent=1 // pred_check_branch
      %78 = sbr.rel (0) target = $region45
    $region44: #{tpu_custom_call.1} parent=1 // pred_region
      %79 = dma.done [#allocation9], 2048
    $region45: #{tpu_custom_call.1} parent=1 // pred_fallthru
      _
    %v80 = vld [vmem:[#allocation2] sm:$0xff]
    %v81 = vld [vmem:[%s2] sm:$0x1]
    %v82 = vld [vmem:[%s4] sm:$0x1]
    %v83 = vld [vmem:[%s6] sm:$0x1]
    %v84 = vld [vmem:[#allocation5] sm:$0xff]
    %v85 = vld [vmem:[#allocation5 + $0x8] sm:$0xff]
    %v86 = vld [vmem:[#allocation5 + $0x10] sm:$0xff]
    %v87 = vld [vmem:[#allocation5 + $0x18] sm:$0xff]
    %v88 = vld [vmem:[#allocation5 + $0x20] sm:$0xff]
    %v89 = vld [vmem:[#allocation5 + $0x28] sm:$0xff]
    %v90 = vld [vmem:[#allocation5 + $0x30] sm:$0xff]
    %v91 = vld [vmem:[#allocation5 + $0x38] sm:$0xff]
    %v92 = vld [vmem:[#allocation5 + $0x40] sm:$0xff]
    %v93 = vld [vmem:[#allocation5 + $0x48] sm:$0xff]
    %v94 = vld [vmem:[#allocation5 + $0x50] sm:$0xff]
    %v95 = vld [vmem:[#allocation5 + $0x58] sm:$0xff]
    %v96 = vld [vmem:[#allocation5 + $0x60] sm:$0xff]
    %v97 = vld [vmem:[#allocation5 + $0x68] sm:$0xff]
    %v98 = vld [vmem:[#allocation5 + $0x70] sm:$0xff]
    %v99 = vld [vmem:[#allocation5 + $0x78] sm:$0xff]
    %v101 = vlaneseq
    %v102 = vshrl.u32 %v101, 7
    %v103 = vsub.s32 0, %v102
    %v104 = vrot.slane %v81, %v103
    %106 = vmatprep.subr.mxu0 0.0
    %107 = vmatpush1.msra.mxu0 %v99
    %108 = vmatprep.subr.mxu0 0.0
    %109 = vmatpush1.msra.mxu0 %v98
    %110 = vmatprep.subr.mxu0 0.0
    %111 = vmatpush1.msra.mxu0 %v97
    %112 = vmatprep.subr.mxu0 0.0
    %113 = vmatpush1.msra.mxu0 %v96
    %114 = vmatprep.subr.mxu0 0.0
    %115 = vmatpush1.msra.mxu0 %v95
    %116 = vmatprep.subr.mxu0 0.0
    %117 = vmatpush1.msra.mxu0 %v94
    %118 = vmatprep.subr.mxu0 0.0
    %119 = vmatpush1.msra.mxu0 %v93
    %120 = vmatprep.subr.mxu0 0.0
    %121 = vmatpush1.msra.mxu0 %v92
    %122 = vmatprep.subr.mxu0 0.0
    %123 = vmatpush1.msra.mxu0 %v91
    %124 = vmatprep.subr.mxu0 0.0
    %125 = vmatpush1.msra.mxu0 %v90
    %126 = vmatprep.subr.mxu0 0.0
    %127 = vmatpush1.msra.mxu0 %v89
    %128 = vmatprep.subr.mxu0 0.0
    %129 = vmatpush1.msra.mxu0 %v88
    %130 = vmatprep.subr.mxu0 0.0
    %131 = vmatpush1.msra.mxu0 %v87
    %132 = vmatprep.subr.mxu0 0.0
    %133 = vmatpush1.msra.mxu0 %v86
    %134 = vmatprep.subr.mxu0 0.0
    %135 = vmatpush1.msra.mxu0 %v85
    %136 = vmatprep.subr.mxu0 0.0
    %137 = vmatpush1.msra.mxu0 %v84
    %138 = vmatprep.subr.mxu0 0.0
    %139 = vmatpush2.msra.mxu0 0.0
    %140 = vmatprep.subr.mxu0 0.0
    %141 = vmatpush2.msra.mxu0 0.0
    %142 = vmatprep.subr.mxu0 0.0
    %143 = vmatpush2.msra.mxu0 0.0
    %144 = vmatprep.subr.mxu0 0.0
    %145 = vmatpush2.msra.mxu0 0.0
    %146 = vmatprep.subr.mxu0 0.0
    %147 = vmatpush2.msra.mxu0 0.0
    %148 = vmatprep.subr.mxu0 0.0
    %149 = vmatpush2.msra.mxu0 0.0
    %150 = vmatprep.subr.mxu0 0.0
    %151 = vmatpush2.msra.mxu0 0.0
    %152 = vmatprep.subr.mxu0 0.0
    %153 = vmatpush2.msra.mxu0 0.0
    %154 = vmatprep.subr.mxu0 0.0
    %155 = vmatpush2.msra.mxu0 0.0
    %156 = vmatprep.subr.mxu0 0.0
    %157 = vmatpush2.msra.mxu0 0.0
    %158 = vmatprep.subr.mxu0 0.0
    %159 = vmatpush2.msra.mxu0 0.0
    %160 = vmatprep.subr.mxu0 0.0
    %161 = vmatpush2.msra.mxu0 0.0
    %162 = vmatprep.subr.mxu0 0.0
    %163 = vmatpush2.msra.mxu0 0.0
    %164 = vmatprep.subr.mxu0 0.0
    %165 = vmatpush2.msra.mxu0 0.0
    %166 = vmatprep.subr.mxu0 0.0
    %167 = vmatpush2.msra.mxu0 0.0
    %168 = vmatprep.subr.mxu0 0.0
    %169 = vmatpush2.msra.mxu0 0.0
    %170 = vmatprep.mubr.f32.mxu0 0.0
    %171 = vmatmul.mubr.f32.gmra.mxu0 %v80
    %v172 = vpop.f32.mrf.mxu0
    %v173 = vadd.f32 %v104, %v172
    %v174 = vpop.f32.mrf.mxu0
    %175 = vdwg.mxu0
    %v176 = vmax.f32 %v173, 0.0
    %v177 = vld [vmem:[#allocation7] sm:$0xff]
    %v178 = vld [vmem:[#allocation7 + $0x8] sm:$0xff]
    %v179 = vld [vmem:[#allocation7 + $0x10] sm:$0xff]
    %v180 = vld [vmem:[#allocation7 + $0x18] sm:$0xff]
    %v181 = vld [vmem:[#allocation7 + $0x20] sm:$0xff]
    %v182 = vld [vmem:[#allocation7 + $0x28] sm:$0xff]
    %v183 = vld [vmem:[#allocation7 + $0x30] sm:$0xff]
    %v184 = vld [vmem:[#allocation7 + $0x38] sm:$0xff]
    %v185 = vld [vmem:[#allocation7 + $0x40] sm:$0xff]
    %v186 = vld [vmem:[#allocation7 + $0x48] sm:$0xff]
    %v187 = vld [vmem:[#allocation7 + $0x50] sm:$0xff]
    %v188 = vld [vmem:[#allocation7 + $0x58] sm:$0xff]
    %v189 = vld [vmem:[#allocation7 + $0x60] sm:$0xff]
    %v190 = vld [vmem:[#allocation7 + $0x68] sm:$0xff]
    %v191 = vld [vmem:[#allocation7 + $0x70] sm:$0xff]
    %v192 = vld [vmem:[#allocation7 + $0x78] sm:$0xff]
    %v194 = vlaneseq
    %v195 = vshrl.u32 %v194, 7
    %v196 = vsub.s32 0, %v195
    %v197 = vrot.slane %v82, %v196
    %199 = vmatprep.subr.mxu0 0.0
    %200 = vmatpush1.msra.mxu0 %v192
    %201 = vmatprep.subr.mxu0 0.0
    %202 = vmatpush1.msra.mxu0 %v191
    %203 = vmatprep.subr.mxu0 0.0
    %204 = vmatpush1.msra.mxu0 %v190
    %205 = vmatprep.subr.mxu0 0.0
    %206 = vmatpush1.msra.mxu0 %v189
    %207 = vmatprep.subr.mxu0 0.0
    %208 = vmatpush1.msra.mxu0 %v188
    %209 = vmatprep.subr.mxu0 0.0
    %210 = vmatpush1.msra.mxu0 %v187
    %211 = vmatprep.subr.mxu0 0.0
    %212 = vmatpush1.msra.mxu0 %v186
    %213 = vmatprep.subr.mxu0 0.0
    %214 = vmatpush1.msra.mxu0 %v185
    %215 = vmatprep.subr.mxu0 0.0
    %216 = vmatpush1.msra.mxu0 %v184
    %217 = vmatprep.subr.mxu0 0.0
    %218 = vmatpush1.msra.mxu0 %v183
    %219 = vmatprep.subr.mxu0 0.0
    %220 = vmatpush1.msra.mxu0 %v182
    %221 = vmatprep.subr.mxu0 0.0
    %222 = vmatpush1.msra.mxu0 %v181
    %223 = vmatprep.subr.mxu0 0.0
    %224 = vmatpush1.msra.mxu0 %v180
    %225 = vmatprep.subr.mxu0 0.0
    %226 = vmatpush1.msra.mxu0 %v179
    %227 = vmatprep.subr.mxu0 0.0
    %228 = vmatpush1.msra.mxu0 %v178
    %229 = vmatprep.subr.mxu0 0.0
    %230 = vmatpush1.msra.mxu0 %v177
    %231 = vmatprep.subr.mxu0 0.0
    %232 = vmatpush2.msra.mxu0 0.0
    %233 = vmatprep.subr.mxu0 0.0
    %234 = vmatpush2.msra.mxu0 0.0
    %235 = vmatprep.subr.mxu0 0.0
    %236 = vmatpush2.msra.mxu0 0.0
    %237 = vmatprep.subr.mxu0 0.0
    %238 = vmatpush2.msra.mxu0 0.0
    %239 = vmatprep.subr.mxu0 0.0
    %240 = vmatpush2.msra.mxu0 0.0
    %241 = vmatprep.subr.mxu0 0.0
    %242 = vmatpush2.msra.mxu0 0.0
    %243 = vmatprep.subr.mxu0 0.0
    %244 = vmatpush2.msra.mxu0 0.0
    %245 = vmatprep.subr.mxu0 0.0
    %246 = vmatpush2.msra.mxu0 0.0
    %247 = vmatprep.subr.mxu0 0.0
    %248 = vmatpush2.msra.mxu0 0.0
    %249 = vmatprep.subr.mxu0 0.0
    %250 = vmatpush2.msra.mxu0 0.0
    %251 = vmatprep.subr.mxu0 0.0
    %252 = vmatpush2.msra.mxu0 0.0
    %253 = vmatprep.subr.mxu0 0.0
    %254 = vmatpush2.msra.mxu0 0.0
    %255 = vmatprep.subr.mxu0 0.0
    %256 = vmatpush2.msra.mxu0 0.0
    %257 = vmatprep.subr.mxu0 0.0
    %258 = vmatpush2.msra.mxu0 0.0
    %259 = vmatprep.subr.mxu0 0.0
    %260 = vmatpush2.msra.mxu0 0.0
    %261 = vmatprep.subr.mxu0 0.0
    %262 = vmatpush2.msra.mxu0 0.0
    %263 = vmatprep.mubr.f32.mxu0 0.0
    %264 = vmatmul.mubr.f32.gmra.mxu0 %v176
    %v265 = vpop.f32.mrf.mxu0
    %v266 = vadd.f32 %v197, %v265
    %v267 = vpop.f32.mrf.mxu0
    %268 = vdwg.mxu0
    %v269 = vmax.f32 %v266, 0.0
    %v270 = vld [vmem:[#allocation8] sm:$0xff]
    %v271 = vld [vmem:[#allocation8 + $0x8] sm:$0xff]
    %v272 = vld [vmem:[#allocation8 + $0x10] sm:$0xff]
    %v273 = vld [vmem:[#allocation8 + $0x18] sm:$0xff]
    %v274 = vld [vmem:[#allocation8 + $0x20] sm:$0xff]
    %v275 = vld [vmem:[#allocation8 + $0x28] sm:$0xff]
    %v276 = vld [vmem:[#allocation8 + $0x30] sm:$0xff]
    %v277 = vld [vmem:[#allocation8 + $0x38] sm:$0xff]
    %v278 = vld [vmem:[#allocation8 + $0x40] sm:$0xff]
    %v279 = vld [vmem:[#allocation8 + $0x48] sm:$0xff]
    %v280 = vld [vmem:[#allocation8 + $0x50] sm:$0xff]
    %v281 = vld [vmem:[#allocation8 + $0x58] sm:$0xff]
    %v282 = vld [vmem:[#allocation8 + $0x60] sm:$0xff]
    %v283 = vld [vmem:[#allocation8 + $0x68] sm:$0xff]
    %v284 = vld [vmem:[#allocation8 + $0x70] sm:$0xff]
    %v285 = vld [vmem:[#allocation8 + $0x78] sm:$0xff]
    %v287 = vlaneseq
    %v288 = vshrl.u32 %v287, 7
    %v289 = vsub.s32 0, %v288
    %v290 = vrot.slane %v83, %v289
    %292 = vmatprep.subr.mxu0 0.0
    %293 = vmatpush1.msra.mxu0 %v285
    %294 = vmatprep.subr.mxu0 0.0
    %295 = vmatpush1.msra.mxu0 %v284
    %296 = vmatprep.subr.mxu0 0.0
    %297 = vmatpush1.msra.mxu0 %v283
    %298 = vmatprep.subr.mxu0 0.0
    %299 = vmatpush1.msra.mxu0 %v282
    %300 = vmatprep.subr.mxu0 0.0
    %301 = vmatpush1.msra.mxu0 %v281
    %302 = vmatprep.subr.mxu0 0.0
    %303 = vmatpush1.msra.mxu0 %v280
    %304 = vmatprep.subr.mxu0 0.0
    %305 = vmatpush1.msra.mxu0 %v279
    %306 = vmatprep.subr.mxu0 0.0
    %307 = vmatpush1.msra.mxu0 %v278
    %308 = vmatprep.subr.mxu0 0.0
    %309 = vmatpush1.msra.mxu0 %v277
    %310 = vmatprep.subr.mxu0 0.0
    %311 = vmatpush1.msra.mxu0 %v276
    %312 = vmatprep.subr.mxu0 0.0
    %313 = vmatpush1.msra.mxu0 %v275
    %314 = vmatprep.subr.mxu0 0.0
    %315 = vmatpush1.msra.mxu0 %v274
    %316 = vmatprep.subr.mxu0 0.0
    %317 = vmatpush1.msra.mxu0 %v273
    %318 = vmatprep.subr.mxu0 0.0
    %319 = vmatpush1.msra.mxu0 %v272
    %320 = vmatprep.subr.mxu0 0.0
    %321 = vmatpush1.msra.mxu0 %v271
    %322 = vmatprep.subr.mxu0 0.0
    %323 = vmatpush1.msra.mxu0 %v270
    %324 = vmatprep.subr.mxu0 0.0
    %325 = vmatpush2.msra.mxu0 0.0
    %326 = vmatprep.subr.mxu0 0.0
    %327 = vmatpush2.msra.mxu0 0.0
    %328 = vmatprep.subr.mxu0 0.0
    %329 = vmatpush2.msra.mxu0 0.0
    %330 = vmatprep.subr.mxu0 0.0
    %331 = vmatpush2.msra.mxu0 0.0
    %332 = vmatprep.subr.mxu0 0.0
    %333 = vmatpush2.msra.mxu0 0.0
    %334 = vmatprep.subr.mxu0 0.0
    %335 = vmatpush2.msra.mxu0 0.0
    %336 = vmatprep.subr.mxu0 0.0
    %337 = vmatpush2.msra.mxu0 0.0
    %338 = vmatprep.subr.mxu0 0.0
    %339 = vmatpush2.msra.mxu0 0.0
    %340 = vmatprep.subr.mxu0 0.0
    %341 = vmatpush2.msra.mxu0 0.0
    %342 = vmatprep.subr.mxu0 0.0
    %343 = vmatpush2.msra.mxu0 0.0
    %344 = vmatprep.subr.mxu0 0.0
    %345 = vmatpush2.msra.mxu0 0.0
    %346 = vmatprep.subr.mxu0 0.0
    %347 = vmatpush2.msra.mxu0 0.0
    %348 = vmatprep.subr.mxu0 0.0
    %349 = vmatpush2.msra.mxu0 0.0
    %350 = vmatprep.subr.mxu0 0.0
    %351 = vmatpush2.msra.mxu0 0.0
    %352 = vmatprep.subr.mxu0 0.0
    %353 = vmatpush2.msra.mxu0 0.0
    %354 = vmatprep.subr.mxu0 0.0
    %355 = vmatpush2.msra.mxu0 0.0
    %356 = vmatprep.mubr.f32.mxu0 0.0
    %357 = vmatmul.mubr.f32.gmra.mxu0 %v269
    %v358 = vpop.f32.mrf.mxu0
    %v359 = vadd.f32 %v290, %v358
    %v360 = vpop.f32.mrf.mxu0
    %361 = vdwg.mxu0
    %v362 = vmul.f32 %v359, 0.5
    %v363 = vtanh.pop %v362
    %v364 = vadd.f32 %v363, 1.0
    %v365 = vmul.f32 %v364, 0.5
    %366 = vst [vmem:[#allocation10] sm:$0xff] %v365
    // Predicated region
    $region46: #{tpu_custom_call.1} parent=1 // pred_check
      _
    $region47: #{tpu_custom_call.1} parent=1 // pred_check_branch
      %368 = sbr.rel (0) target = $region49
    $region48: #{tpu_custom_call.1} parent=1 // pred_region
      %s370 = ssub.s32 128, 128
      %371 = vsyncadd [#allocation4], %s370
      %s373 = sshll.u32 [#allocation10], 4
      %s374 = int_to_ptr.vmem [resolvable:$true] %s373
      %376 = dma.vmem_to_hbm [thread:$0]  %s374, 128, %s7, [#allocation4]
    $region49: #{tpu_custom_call.1} parent=1 // pred_fallthru
      _
    // Predicated region
    $region50: #{tpu_custom_call.1} parent=1 // pred_check
      _
    $region51: #{tpu_custom_call.1} parent=1 // pred_check_branch
      %378 = sbr.rel (0) target = $region53
    $region52: #{tpu_custom_call.1} parent=1 // pred_region
      %379 = dma.done [#allocation4], 128
    $region53: #{tpu_custom_call.1} parent=1 // pred_fallthru
      _
    %380 = vsyncpa [#allocation3], 1
    %381 = vsyncpa [#allocation6], 1
    %382 = vsyncpa [#allocation9], 1
    %383 = vsyncpa [#allocation4], 1

</llo_original>
